<compile_context>
chip_gen: v6e
topology: v6e:2x2x1
jax: 0.10.0
libtpu: 0.0.40
codegen_flags: <defaults>
</compile_context>

<pallas_src>
import jax
import jax.numpy as jnp
from jax.experimental import pallas as pl
from jax.experimental.pallas import tpu as pltpu


def moe_combine_kernel(x_ref, g_ref, w_ref, o_ref, acc_ref):
    """Grid = (out_hidden_tiles j, token_tiles i, in_hidden_tiles k, experts e).

    x_ref:   [tT, tK]  bf16 token K-tile (block index (i, k); slow-varying,
                       changes only once per E inner steps)
    g_ref:   [tT, 1]   f32 gate column softmax(x@RM)[:, e] for this token tile
    w_ref:   [tK, tN]  bf16 expert-weight tile (leading expert dim squeezed);
                       the single fast-varying HBM stream
    o_ref:   [tT, tN]  bf16 output block (same block for all (k, e))
    acc_ref: [tT, tN]  f32 resident accumulator
    """
    k = pl.program_id(2)
    e = pl.program_id(3)
    n_k = pl.num_programs(2)
    n_e = pl.num_programs(3)

    @pl.when((k == 0) & (e == 0))
    def _init():
        acc_ref[...] = jnp.zeros_like(acc_ref)

    # Expert matmul tile on the MXU (bf16 operands, f32 accumulation).  The
    # per-step [tT, tN] gate multiply is a VPU op on a different bundle slot
    # and is hidden under the ~tK-times-larger MXU work.
    expert_out = jnp.dot(x_ref[...], w_ref[...],
                         preferred_element_type=jnp.float32)   # [tT, tN] f32
    acc_ref[...] += g_ref[...] * expert_out

    @pl.when((k == n_k - 1) & (e == n_e - 1))
    def _finalize():
        o_ref[...] = acc_ref[...].astype(o_ref.dtype)


def inverse_moe(x, routing_matrix, expert_weights, *,
                tt=512, tn=512, tk=2048,
                out_dtype=jnp.bfloat16, vmem_limit_bytes=None):
    """out[t, :] = sum_e softmax(x @ RM)[t, e] * (x @ W_e)[t, :]."""
    T, H = x.shape
    E, h_in, h_out = expert_weights.shape
    assert h_in == H and h_out == H and routing_matrix.shape == (H, E)

    tt = min(tt, T)
    tn = min(tn, H)
    tk = min(tk, H)
    assert T % tt == 0 and H % tn == 0 and H % tk == 0, "dims must tile evenly"
    n_t, n_n, n_k = T // tt, H // tn, H // tk

    # Routing in exact f32 XLA, hoisted out of the kernel (perf + precision:
    # no per-block recompute, no approx reciprocal, f32 inputs to the softmax).
    probs = jax.nn.softmax(
        x.astype(jnp.float32) @ routing_matrix.astype(jnp.float32), axis=-1)
    # [E, T, 1]: each grid step DMAs one contiguous tT*4-byte gate column.
    gates = jnp.transpose(probs, (1, 0))[:, :, None]

    # bf16 MXU operands (halves weight-streaming bytes), f32 accumulation.
    x_bf16 = x.astype(jnp.bfloat16)
    w_bf16 = expert_weights.astype(jnp.bfloat16)

    return pl.pallas_call(
        moe_combine_kernel,
        out_shape=jax.ShapeDtypeStruct((T, H), out_dtype),
        grid_spec=pltpu.PrefetchScalarGridSpec(
            num_scalar_prefetch=0,
            # j (output columns) leads and is the only "parallel" axis so a
            # megacore split lands on disjoint expert-weight columns.  The
            # reduction axes (k, e) are innermost with e fastest, so the expert
            # weight tile is the only fast-varying DMA and the x K-tile is
            # refetched just once per E steps.
            grid=(n_n, n_t, n_k, E),
            in_specs=[
                # x K-tile: slow-varying (changes only when k changes).
                pl.BlockSpec((tt, tk), lambda j, i, k, e: (i, k)),
                # Gate column for (expert e, token tile i): tiny per-step DMA.
                pl.BlockSpec((None, tt, 1), lambda j, i, k, e: (e, i, 0)),
                # Expert-weight tile: the single fast-varying stream.  If its
                # DMA is still exposed in a trace, add
                # pipeline_mode=pl.Buffered(3) here (+1 tk*tn bf16 buffer).
                pl.BlockSpec((None, tk, tn), lambda j, i, k, e: (e, k, j)),
            ],
            out_specs=pl.BlockSpec((tt, tn), lambda j, i, k, e: (i, j)),
            scratch_shapes=[pltpu.VMEM((tt, tn), jnp.float32)],
        ),
        compiler_params=pltpu.CompilerParams(
            dimension_semantics=("parallel", "arbitrary",
                                 "arbitrary", "arbitrary"),
            vmem_limit_bytes=vmem_limit_bytes,
        ),
    )(x_bf16, gates, w_bf16)


def inverse_moe_ref(x, routing_matrix, expert_weights):
    """Pure-JAX f32 reference for correctness checking."""
    probs = jax.nn.softmax(x @ routing_matrix, axis=-1)          # [T, E]
    expert_outs = jnp.einsum("th,ehd->etd", x, expert_weights)   # [E, T, H]
    return jnp.einsum("te,etd->td", probs, expert_outs)


if __name__ == "__main__":
    # Small shapes that still exercise all four grid axes: grid = (2, 2, 2, 4).
    T, H, E = 128, 256, 4

    key = jax.random.PRNGKey(0)
    kx, kr, kw = jax.random.split(key, 3)
    x = jax.random.normal(kx, (T, H), dtype=jnp.float32)
    routing_matrix = jax.random.normal(kr, (H, E), dtype=jnp.float32) * 0.1
    expert_weights = jax.random.normal(kw, (E, H, H), dtype=jnp.float32) * 0.05

    out = inverse_moe(x, routing_matrix, expert_weights, tt=64, tn=128, tk=128)
    out = jax.block_until_ready(out)

    ref = inverse_moe_ref(x, routing_matrix, expert_weights)
    assert out.shape == (T, H)
    out_f32 = out.astype(jnp.float32)
    # bf16 MXU operands + bf16 output => looser tolerance than the pure-f32 ref.
    max_err = float(jnp.max(jnp.abs(out_f32 - ref)))
    assert jnp.allclose(out_f32, ref, atol=3e-2, rtol=3e-2), \
        f"mismatch vs reference (max abs err {max_err})"

    print("KERNEL_OK")
</pallas_src>

<mosaic_0001>
module attributes {stable_mosaic.version = 11 : i64} {
  func.func @moe_combine_kernel(%arg0: i32, %arg1: i32, %arg2: i32, %arg3: i32, %arg4: memref<64x128xbf16, #tpu.memory_space<vmem>>, %arg5: memref<1x64x1xf32, #tpu.memory_space<vmem>>, %arg6: memref<1x128x128xbf16, #tpu.memory_space<vmem>>, %arg7: memref<64x128xbf16, #tpu.memory_space<vmem>>, %arg8: memref<64x128xf32, #tpu.memory_space<vmem>>) attributes {dimension_semantics = [#tpu.dimension_semantics<parallel>, #tpu.dimension_semantics<arbitrary>, #tpu.dimension_semantics<arbitrary>, #tpu.dimension_semantics<arbitrary>], iteration_bounds = array<i64: 2, 2, 2, 4>, scalar_prefetch = 0 : i64, scratch_operands = 1 : i64, tpu.core_type = #tpu.core_type<tc>, window_params = [{transform_indices = @transform_0, window_bounds = array<i64: 64, 128>}, {transform_indices = @transform_1, window_bounds = array<i64: 1, 64, 1>}, {transform_indices = @transform_2, window_bounds = array<i64: 1, 128, 128>}, {transform_indices = @transform_3, window_bounds = array<i64: 64, 128>}]} {
    %c0_i32 = arith.constant 0 : i32
    %0 = arith.cmpi eq, %arg2, %c0_i32 : i32
    %c0_i32_0 = arith.constant 0 : i32
    %1 = arith.cmpi eq, %arg3, %c0_i32_0 : i32
    %2 = arith.andi %0, %1 : i1
    %3 = arith.extui %2 : i1 to i32
    %c0_i32_1 = arith.constant 0 : i32
    %4 = arith.cmpi ne, %3, %c0_i32_1 : i32
    scf.if %4 {
      %cst_14 = arith.constant 0.000000e+00 : f32
      %21 = vector.broadcast %cst_14 : f32 to vector<64x128xf32>
      %c0_15 = arith.constant 0 : index
      %c0_16 = arith.constant 0 : index
      %22 = vector.load %arg8[%c0_15, %c0_16] : memref<64x128xf32, #tpu.memory_space<vmem>>, vector<64x128xf32>
      tpu.vector_store %arg8[%c0_15, %c0_16], %21 {strides = array<i32>} : memref<64x128xf32, #tpu.memory_space<vmem>>, vector<64x128xf32>,
    } else {
    }
    %c0 = arith.constant 0 : index
    %c0_2 = arith.constant 0 : index
    %5 = vector.load %arg4[%c0, %c0_2] : memref<64x128xbf16, #tpu.memory_space<vmem>>, vector<64x128xbf16>
    %c0_3 = arith.constant 0 : index
    %c0_4 = arith.constant 0 : index
    %c0_5 = arith.constant 0 : index
    %6 = vector.load %arg6[%c0_3, %c0_4, %c0_5] : memref<1x128x128xbf16, #tpu.memory_space<vmem>>, vector<1x128x128xbf16>
    %7 = vector.shape_cast %6 : vector<1x128x128xbf16> to vector<128x128xbf16>
    %cst = arith.constant dense<0.000000e+00> : vector<64x128xf32>
    %8 = tpu.matmul %5, %7, %cst {dimension_numbers = #tpu.dot_dimension_numbers<[1], [0], [0], [1], [0, 0, 1, 1], [], []>} : vector<64x128xbf16>, vector<128x128xbf16>, vector<64x128xf32> -> vector<64x128xf32>
    %c0_6 = arith.constant 0 : index
    %c0_7 = arith.constant 0 : index
    %9 = vector.load %arg8[%c0_6, %c0_7] : memref<64x128xf32, #tpu.memory_space<vmem>>, vector<64x128xf32>
    %c0_8 = arith.constant 0 : index
    %c0_9 = arith.constant 0 : index
    %c0_10 = arith.constant 0 : index
    %10 = vector.load %arg5[%c0_8, %c0_9, %c0_10] : memref<1x64x1xf32, #tpu.memory_space<vmem>>, vector<1x64x1xf32>
    %11 = vector.shape_cast %10 : vector<1x64x1xf32> to vector<64x1xf32>
    %12 = vector.broadcast %11 : vector<64x1xf32> to vector<64x128xf32>
    %13 = arith.mulf %12, %8 : vector<64x128xf32>
    %14 = arith.addf %9, %13 : vector<64x128xf32>
    %c0_11 = arith.constant 0 : index
    %c0_12 = arith.constant 0 : index
    %15 = vector.load %arg8[%c0_11, %c0_12] : memref<64x128xf32, #tpu.memory_space<vmem>>, vector<64x128xf32>
    tpu.vector_store %arg8[%c0_11, %c0_12], %14 {strides = array<i32>} : memref<64x128xf32, #tpu.memory_space<vmem>>, vector<64x128xf32>,
    %c1_i32 = arith.constant 1 : i32
    %16 = arith.cmpi eq, %arg2, %c1_i32 : i32
    %c3_i32 = arith.constant 3 : i32
    %17 = arith.cmpi eq, %arg3, %c3_i32 : i32
    %18 = arith.andi %16, %17 : i1
    %19 = arith.extui %18 : i1 to i32
    %c0_i32_13 = arith.constant 0 : i32
    %20 = arith.cmpi ne, %19, %c0_i32_13 : i32
    scf.if %20 {
      %c0_14 = arith.constant 0 : index
      %c0_15 = arith.constant 0 : index
      %21 = vector.load %arg8[%c0_14, %c0_15] : memref<64x128xf32, #tpu.memory_space<vmem>>, vector<64x128xf32>
      %22 = arith.truncf %21 : vector<64x128xf32> to vector<64x128xbf16>
      %c0_16 = arith.constant 0 : index
      %c0_17 = arith.constant 0 : index
      %23 = vector.load %arg7[%c0_16, %c0_17] : memref<64x128xbf16, #tpu.memory_space<vmem>>, vector<64x128xbf16>
      tpu.vector_store %arg7[%c0_16, %c0_17], %22 {strides = array<i32>} : memref<64x128xbf16, #tpu.memory_space<vmem>>, vector<64x128xbf16>,
    } else {
    }
    return
  }
  func.func @transform_0(%arg0: i32, %arg1: i32, %arg2: i32, %arg3: i32) -> (i32, i32) {
    %c0_i32 = arith.constant 0 : i32
    return %arg1, %arg2 : i32, i32
  }
  func.func @transform_1(%arg0: i32, %arg1: i32, %arg2: i32, %arg3: i32) -> (i32, i32, i32) {
    %c0_i32 = arith.constant 0 : i32
    %c0_i32_0 = arith.constant 0 : i32
    return %arg3, %arg1, %c0_i32 : i32, i32, i32
  }
  func.func @transform_2(%arg0: i32, %arg1: i32, %arg2: i32, %arg3: i32) -> (i32, i32, i32) {
    %c0_i32 = arith.constant 0 : i32
    return %arg3, %arg2, %arg0 : i32, i32, i32
  }
  func.func @transform_3(%arg0: i32, %arg1: i32, %arg2: i32, %arg3: i32) -> (i32, i32) {
    %c0_i32 = arith.constant 0 : i32
    return %arg1, %arg0 : i32, i32
  }
}

</mosaic_0001>

<llo_original>
// kernel: tpu_custom_call.1
$region0: #{tpu_custom_call.1}
  #allocation0 [shape = 'u32[]', space=smem, size = 0x4, offset = 0x4, fixed_abs, tag = 'smem constant byte address 0x4 - core index']
  #allocation1 [shape = 'u32[144,128]{1,0:T(1,128)}', space=vmem, size = 0x12000, scoped, tag = 'internal scratch']
  #allocation2 [shape = 'f32[64,128]{1,0:T(8,128)}', space=vmem, size = 0x8000, scoped, tag = 'scratch operand']
  %s0 = inlined_call_operand.vmem [shape: bf16[128,256], index: 0, kind: input, shape index: {}]
  %s1 = inlined_call_operand.vmem [shape: f32[4,128,1], index: 1, kind: input, shape index: {}]
  %s2 = inlined_call_operand.hbm [shape: bf16[4,256,256], index: 2, kind: input, shape index: {}]
  %s3 = inlined_call_operand.hbm [shape: bf16[128,256], index: 3, kind: output, shape index: {}]
  %s4 = sld [smem:[#allocation0]]
  $region98: #{tpu_custom_call.1} parent=0
    _
  %s6 = ssub.s32 1, %s4
  %s7 = scalar_select 0, %s6, %s4
  $region1: #{tpu_custom_call.1} parent=0
    #allocation3 [shape = 'u8[32768]{0}', space=vmem, size = 0x8000, scoped, tag = 'input window, operand 0']
    #allocation4 [shape = 'u8[65536]{0}', space=vmem, size = 0x10000, scoped, tag = 'input window, operand 2']
    #allocation5 [shape = 's32[2]{0}', space=sflag, size = 0x8, scoped, tag = 'scoped memory for tpu_custom_call.1']
    #allocation6 [shape = 's32[2]{0}', space=sflag, size = 0x8, scoped, tag = 'scoped memory for tpu_custom_call.1']
    #allocation7 [shape = 'u8[32768]{0}', space=vmem, size = 0x8000, scoped, tag = 'output window, operand 0']
    %8 = vsyncpa [#allocation5], 0
    %s9 = scalar_lea.sflag [#allocation5], 1
    %10 = vsyncpa %s9, 0
    %11 = vsyncpa [#allocation6], 0
    %s12 = scalar_lea.sflag [#allocation6], 1
    %13 = vsyncpa %s12, 0
    loop: start=0, step=1, limit=34
    $region2: #{tpu_custom_call.1} parent=1 // loop_pre_header
      _
    $region3: #{tpu_custom_call.1} parent=1 // loop_header
      %s15 = sphi 0, %s19
      %p16 = scmp.ge.s32.totalorder %s15, 34
      %s22 = sphi 0, %s48
      %s23 = sphi 0, %s44
      %s24 = sphi 0, %s40
      %s25 = sphi 0, %s36
      %s26 = sphi 0, %s22
      %s27 = sphi 0, %s23
      %s28 = sphi 0, %s24
      %s29 = sphi 0, %s25
      %s30 = sphi 0, %s26
      %s31 = sphi 0, %s27
      %s32 = sphi 0, %s28
      %s33 = sphi 0, %s29
      %s53 = sphi 0, %s55
      %s56 = sphi 0, %s53
      %s57 = sphi 0, %s56
      %s73 = sphi 0, %s57
      %s81 = sphi 0, %s83
      %s84 = sphi 0, %s81
      %s85 = sphi 0, %s84
      %s101 = sphi 0, %s85
      %s111 = sphi 0, %s113
      %s114 = sphi 0, %s111
      %s115 = sphi 0, %s114
      %s131 = sphi 0, %s115
      %s139 = sphi 0, %s141
      %s142 = sphi 0, %s139
      %s143 = sphi 0, %s142
      %s159 = sphi 0, %s143
    $region4: #{tpu_custom_call.1} parent=1 // loop_header_branch
      %18 = sbr.rel (%p16) target = $region8
    $region5: #{tpu_custom_call.1} parent=1 // loop_body
      %s20 = ssub.s32 %s15, 1
      %s21 = ssub.s32 %s15, 2
      %s34 = sadd.s32 1, %s25
      %p35 = scmp.ge.s32.totalorder %s34, 4
      %s36 = scalar_select %p35, 0, %s34
      %s37 = sadd.s32 1, %s24
      %s38 = scalar_select %p35, %s37, %s24
      %p39 = scmp.ge.s32.totalorder %s38, 2
      %s40 = scalar_select %p39, 0, %s38
      %s41 = sadd.s32 1, %s23
      %s42 = scalar_select %p39, %s41, %s23
      %p43 = scmp.ge.s32.totalorder %s42, 2
      %s44 = scalar_select %p43, 0, %s42
      %s45 = sadd.s32 1, %s22
      %s46 = scalar_select %p43, %s45, %s22
      %p47 = scmp.ge.s32.totalorder %s46, 2
      %s48 = scalar_select %p47, 0, %s46
      %s49 = ssub.s32 %s23, %s44
      %s50 = ssub.s32 %s24, %s40
      %s51 = sor.u32 %s49, %s50
      %p52 = scmp.eq.s32.totalorder %s51, 0
      %s54 = sadd.s32 %s53, 1
      %s55 = scalar_select %p52, %s53, %s54
      %p58 = pneg %p52
      %p59 = scmp.eq.s32.totalorder %s15, 31
      %p60 = por %p58, %p59
      %p61 = scmp.ne.s32.totalorder %s53, %s56
      %p62 = scmp.eq.s32.totalorder %s15, 0
      %p63 = por %p61, %p62
      %p64 = scmp.ne.s32.totalorder %s53, %s56
      %p65 = scmp.eq.s32.totalorder %s20, 31
      %p66 = por %p64, %p65
      %p67 = scmp.ne.s32.totalorder %s56, %s57
      %p68 = scmp.eq.s32.totalorder %s20, 0
      %p69 = por %p67, %p68
      %p70 = scmp.ne.s32.totalorder %s56, %s57
      %p71 = scmp.eq.s32.totalorder %s21, 31
      %p72 = por %p70, %p71
      %p74 = scmp.ne.s32.totalorder %s57, %s73
      %p75 = scmp.eq.s32.totalorder %s21, 0
      %p76 = por %p74, %p75
      %s77 = ssub.s32 %s25, %s36
      %s78 = ssub.s32 %s23, %s44
      %s79 = sor.u32 %s77, %s78
      %p80 = scmp.eq.s32.totalorder %s79, 0
      %s82 = sadd.s32 %s81, 1
      %s83 = scalar_select %p80, %s81, %s82
      %p86 = pneg %p80
      %p87 = scmp.eq.s32.totalorder %s15, 31
      %p88 = por %p86, %p87
      %p89 = scmp.ne.s32.totalorder %s81, %s84
      %p90 = scmp.eq.s32.totalorder %s15, 0
      %p91 = por %p89, %p90
      %p92 = scmp.ne.s32.totalorder %s81, %s84
      %p93 = scmp.eq.s32.totalorder %s20, 31
      %p94 = por %p92, %p93
      %p95 = scmp.ne.s32.totalorder %s84, %s85
      %p96 = scmp.eq.s32.totalorder %s20, 0
      %p97 = por %p95, %p96
      %p98 = scmp.ne.s32.totalorder %s84, %s85
      %p99 = scmp.eq.s32.totalorder %s21, 31
      %p100 = por %p98, %p99
      %p102 = scmp.ne.s32.totalorder %s85, %s101
      %p103 = scmp.eq.s32.totalorder %s21, 0
      %p104 = por %p102, %p103
      %s105 = ssub.s32 %s25, %s36
      %s106 = ssub.s32 %s24, %s40
      %s107 = sor.u32 %s105, %s106
      %s108 = ssub.s32 %s22, %s48
      %s109 = sor.u32 %s107, %s108
      %p110 = scmp.eq.s32.totalorder %s109, 0
      %s112 = sadd.s32 %s111, 1
      %s113 = scalar_select %p110, %s111, %s112
      %p116 = pneg %p110
      %p117 = scmp.eq.s32.totalorder %s15, 31
      %p118 = por %p116, %p117
      %p119 = scmp.ne.s32.totalorder %s111, %s114
      %p120 = scmp.eq.s32.totalorder %s15, 0
      %p121 = por %p119, %p120
      %p122 = scmp.ne.s32.totalorder %s111, %s114
      %p123 = scmp.eq.s32.totalorder %s20, 31
      %p124 = por %p122, %p123
      %p125 = scmp.ne.s32.totalorder %s114, %s115
      %p126 = scmp.eq.s32.totalorder %s20, 0
      %p127 = por %p125, %p126
      %p128 = scmp.ne.s32.totalorder %s114, %s115
      %p129 = scmp.eq.s32.totalorder %s21, 31
      %p130 = por %p128, %p129
      %p132 = scmp.ne.s32.totalorder %s115, %s131
      %p133 = scmp.eq.s32.totalorder %s21, 0
      %p134 = por %p132, %p133
      %s135 = ssub.s32 %s23, %s44
      %s136 = ssub.s32 %s22, %s48
      %s137 = sor.u32 %s135, %s136
      %p138 = scmp.eq.s32.totalorder %s137, 0
      %s140 = sadd.s32 %s139, 1
      %s141 = scalar_select %p138, %s139, %s140
      %p144 = pneg %p138
      %p145 = scmp.eq.s32.totalorder %s15, 31
      %p146 = por %p144, %p145
      %p147 = scmp.ne.s32.totalorder %s139, %s142
      %p148 = scmp.eq.s32.totalorder %s15, 0
      %p149 = por %p147, %p148
      %p150 = scmp.ne.s32.totalorder %s139, %s142
      %p151 = scmp.eq.s32.totalorder %s20, 31
      %p152 = por %p150, %p151
      %p153 = scmp.ne.s32.totalorder %s142, %s143
      %p154 = scmp.eq.s32.totalorder %s20, 0
      %p155 = por %p153, %p154
      %p156 = scmp.ne.s32.totalorder %s142, %s143
      %p157 = scmp.eq.s32.totalorder %s21, 31
      %p158 = por %p156, %p157
      %p160 = scmp.ne.s32.totalorder %s143, %s159
      %p161 = scmp.eq.s32.totalorder %s21, 0
      %p162 = por %p160, %p161
      %p163 = scmp.le.s32.totalorder 1, %s15
      %p164 = scmp.lt.s32.totalorder %s15, 33
      %p165 = pnand %p163, %p164
      %p166 = pneg %p165
      // Predicated region
      $region9: #{tpu_custom_call.1} parent=5 // pred_check
        _
      $region10: #{tpu_custom_call.1} parent=5 // pred_check_branch
        %168 = sbr.rel (%p165) target = $region12
      $region11: #{tpu_custom_call.1} parent=5 // pred_region
        %s169 = ssub.s32 %s15, 1
      $region12: #{tpu_custom_call.1} parent=5 // pred_fallthru
        _
      %p170 = scmp.lt.s32.totalorder %s15, 32
      // Predicated region
      $region13: #{tpu_custom_call.1} parent=5 // pred_check
        %p171 = pneg %p170
      $region14: #{tpu_custom_call.1} parent=5 // pred_check_branch
        %173 = sbr.rel (%p171) target = $region16
      $region15: #{tpu_custom_call.1} parent=5 // pred_region
        // Predicated region
        $region17: #{tpu_custom_call.1} parent=15 // pred_check
          %p174 = pneg %p63
        $region18: #{tpu_custom_call.1} parent=15 // pred_check_branch
          %176 = sbr.rel (%p174) target = $region20
        $region19: #{tpu_custom_call.1} parent=15 // pred_region
          %s177 = sand.u32 %s53, 1
          %s178 = sand.u32 %s53, 1
          %s179 = smul.addr %s178, 32
          %s180 = scalar_lea.vmem [#allocation3], %s179
          %s181 = smul.u32 8, %s23
          %s182 = smul.addr %s181, 2
          %s183 = sadd.s32 %s24, %s182
          %s184 = smul.addr %s183, 4
          %s185 = scalar_lea.vmem %s0, %s184
          // Predicated region
          $region21: #{tpu_custom_call.1} parent=19 // pred_check
            _
          $region22: #{tpu_custom_call.1} parent=19 // pred_check_branch
            %187 = sbr.rel (0) target = $region24
          $region23: #{tpu_custom_call.1} parent=19 // pred_region
            // Predicated region
            $region25: #{tpu_custom_call.1} parent=23 // pred_check
              _
            $region26: #{tpu_custom_call.1} parent=23 // pred_check_branch
              %189 = sbr.rel target = $region28
            $region27: #{tpu_custom_call.1} parent=23 // pred_region
              // Predicated region
              $region40: #{tpu_custom_call.1} parent=27 // pred_check
                _
              $region41: #{tpu_custom_call.1} parent=27 // pred_check_branch
                %219 = sbr.rel (0) target = $region43
              $region42: #{tpu_custom_call.1} parent=27 // pred_region
                loop: start=0, step=1, limit=1
                $region44: #{tpu_custom_call.1} parent=42 // loop_pre_header
                  _
                $region45: #{tpu_custom_call.1} parent=42 // loop_header
                  %s221 = sphi 0, %s225
                  %p222 = scmp.ge.s32.totalorder %s221, 1
                  %s226 = sphi %s185, %s185
                  %s227 = sphi %s180, %s180
                $region46: #{tpu_custom_call.1} parent=42 // loop_header_branch
                  %224 = sbr.rel (%p222) target = $region50
                $region47: #{tpu_custom_call.1} parent=42 // loop_body
                  _
                $region48: #{tpu_custom_call.1} parent=42 // loop_footer
                  %s225 = sadd.s32 1, %s221
                $region49: #{tpu_custom_call.1} parent=42 // loop_footer_branch
                  %220 = sbr.rel target = $region45
                $region50: #{tpu_custom_call.1} parent=42 // loop_exit
                  _
                %s229 = ssub.s32 16, 1
                loop: start=0, step=1, limit=1
                $region51: #{tpu_custom_call.1} parent=42 // loop_pre_header
                  _
                $region52: #{tpu_custom_call.1} parent=42 // loop_header
                  %s231 = sphi 0, %s235
                  %p232 = scmp.ge.s32.totalorder %s231, 1
                  %s236 = sphi %s185, %s185
                  %s237 = sphi %s180, %s180
                $region53: #{tpu_custom_call.1} parent=42 // loop_header_branch
                  %234 = sbr.rel (%p232) target = $region57
                $region54: #{tpu_custom_call.1} parent=42 // loop_body
                  %v238 = vld [vmem:[%s236] sm:%s229]
                  %239 = vst [vmem:[%s237] sm:%s229] %v238
                  %v240 = vld [vmem:[%s236 + $0x8] sm:%s229]
                  %241 = vst [vmem:[%s237 + $0x4] sm:%s229] %v240
                  %v242 = vld [vmem:[%s236 + $0x10] sm:%s229]
                  %243 = vst [vmem:[%s237 + $0x8] sm:%s229] %v242
                  %v244 = vld [vmem:[%s236 + $0x18] sm:%s229]
                  %245 = vst [vmem:[%s237 + $0xc] sm:%s229] %v244
                  %v246 = vld [vmem:[%s236 + $0x20] sm:%s229]
                  %247 = vst [vmem:[%s237 + $0x10] sm:%s229] %v246
                  %v248 = vld [vmem:[%s236 + $0x28] sm:%s229]
                  %249 = vst [vmem:[%s237 + $0x14] sm:%s229] %v248
                  %v250 = vld [vmem:[%s236 + $0x30] sm:%s229]
                  %251 = vst [vmem:[%s237 + $0x18] sm:%s229] %v250
                  %v252 = vld [vmem:[%s236 + $0x38] sm:%s229]
                  %253 = vst [vmem:[%s237 + $0x1c] sm:%s229] %v252
                $region55: #{tpu_custom_call.1} parent=42 // loop_footer
                  %s235 = sadd.s32 1, %s231
                $region56: #{tpu_custom_call.1} parent=42 // loop_footer_branch
                  %230 = sbr.rel target = $region52
                $region57: #{tpu_custom_call.1} parent=42 // loop_exit
                  _
              $region43: #{tpu_custom_call.1} parent=27 // pred_fallthru
                _
            $region28: #{tpu_custom_call.1} parent=23 // pred_fallthru
              _
            // Predicated region
            $region29: #{tpu_custom_call.1} parent=23 // pred_check
              _
            $region30: #{tpu_custom_call.1} parent=23 // pred_check_branch
              %191 = sbr.rel (0) target = $region32
            $region31: #{tpu_custom_call.1} parent=23 // pred_region
              %s193 = ssub.s32 16, 1
              loop: start=0, step=1, limit=1
              $region33: #{tpu_custom_call.1} parent=31 // loop_pre_header
                _
              $region34: #{tpu_custom_call.1} parent=31 // loop_header
                %s195 = sphi 0, %s199
                %p196 = scmp.ge.s32.totalorder %s195, 1
                %s200 = sphi %s185, %s185
                %s201 = sphi %s180, %s180
              $region35: #{tpu_custom_call.1} parent=31 // loop_header_branch
                %198 = sbr.rel (%p196) target = $region39
              $region36: #{tpu_custom_call.1} parent=31 // loop_body
                %v202 = vld [vmem:[%s200] sm:%s193]
                %203 = vst [vmem:[%s201] sm:%s193] %v202
                %v204 = vld [vmem:[%s200 + $0x8] sm:%s193]
                %205 = vst [vmem:[%s201 + $0x4] sm:%s193] %v204
                %v206 = vld [vmem:[%s200 + $0x10] sm:%s193]
                %207 = vst [vmem:[%s201 + $0x8] sm:%s193] %v206
                %v208 = vld [vmem:[%s200 + $0x18] sm:%s193]
                %209 = vst [vmem:[%s201 + $0xc] sm:%s193] %v208
                %v210 = vld [vmem:[%s200 + $0x20] sm:%s193]
                %211 = vst [vmem:[%s201 + $0x10] sm:%s193] %v210
                %v212 = vld [vmem:[%s200 + $0x28] sm:%s193]
                %213 = vst [vmem:[%s201 + $0x14] sm:%s193] %v212
                %v214 = vld [vmem:[%s200 + $0x30] sm:%s193]
                %215 = vst [vmem:[%s201 + $0x18] sm:%s193] %v214
                %v216 = vld [vmem:[%s200 + $0x38] sm:%s193]
                %217 = vst [vmem:[%s201 + $0x1c] sm:%s193] %v216
              $region37: #{tpu_custom_call.1} parent=31 // loop_footer
                %s199 = sadd.s32 1, %s195
              $region38: #{tpu_custom_call.1} parent=31 // loop_footer_branch
                %194 = sbr.rel target = $region34
              $region39: #{tpu_custom_call.1} parent=31 // loop_exit
                _
            $region32: #{tpu_custom_call.1} parent=23 // pred_fallthru
              _
          $region24: #{tpu_custom_call.1} parent=19 // pred_fallthru
            _
          %254 = vnop
        $region20: #{tpu_custom_call.1} parent=15 // pred_fallthru
          _
        // Predicated region
        $region58: #{tpu_custom_call.1} parent=15 // pred_check
          %p255 = pneg %p91
        $region59: #{tpu_custom_call.1} parent=15 // pred_check_branch
          %257 = sbr.rel (%p255) target = $region61
        $region60: #{tpu_custom_call.1} parent=15 // pred_region
          %s258 = smul.u32 8, %s23
          %p259 = scmp.lt.s32.totalorder %s25, 3
          %s260 = scalar_select %p259, %s25, 3
          %p261 = scmp.lt.s32.totalorder %s258, 15
          %s262 = scalar_select %p261, %s258, 15
          %s263 = smul.addr %s260, 16
          %s264 = sadd.s32 %s262, %s263
          %s265 = smul.addr %s264, 8
          %s266 = scalar_lea.vmem %s1, %s265
          %s267 = smul.u32 8, %s23
        $region61: #{tpu_custom_call.1} parent=15 // pred_fallthru
          _
        // Predicated region
        $region62: #{tpu_custom_call.1} parent=15 // pred_check
          %p268 = pneg %p121
        $region63: #{tpu_custom_call.1} parent=15 // pred_check_branch
          %270 = sbr.rel (%p268) target = $region65
        $region64: #{tpu_custom_call.1} parent=15 // pred_region
          %s271 = sand.u32 %s111, 1
          %s272 = scalar_lea.sflag [#allocation5], %s271
          %s273 = sand.u32 %s111, 1
          %s274 = smul.addr %s273, 64
          %s275 = scalar_lea.vmem [#allocation4], %s274
          %s276 = smul.u32 16, %s24
          %s278 = ssub.s32 1024, 1024
          %279 = vsyncadd %s272, %s278
          %s280 = smul.addr %s276, 2
          %s281 = sadd.s32 %s22, %s280
          %s282 = smul.addr %s25, 64
          %s283 = sadd.s32 %s281, %s282
          %s284 = smul.addr %s283, 64
          %s285 = scalar_lea.hbm %s2, %s284
          %s286 = sshll.u32 %s275, 4
          %s287 = int_to_ptr.vmem [resolvable:$true] %s286
          %292 = dma.hbm_to_vmem [thread:$0]  %s285, 1024, %s287, %s272, 128, 64, 4
        $region65: #{tpu_custom_call.1} parent=15 // pred_fallthru
          _
      $region16: #{tpu_custom_call.1} parent=5 // pred_fallthru
        _
      %p293 = scmp.le.s32.totalorder 1, %s15
      %p294 = scmp.lt.s32.totalorder %s15, 33
      %p295 = pnand %p293, %p294
      %p296 = pneg %p295
      // Predicated region
      $region66: #{tpu_custom_call.1} parent=5 // pred_check
        _
      $region67: #{tpu_custom_call.1} parent=5 // pred_check_branch
        %298 = sbr.rel (%p295) target = $region69
      $region68: #{tpu_custom_call.1} parent=5 // pred_region
        %s299 = ssub.s32 %s15, 1
        %s300 = sand.u32 %s56, 1
        %s301 = sand.u32 %s56, 1
        %s302 = smul.addr %s301, 32
        %s303 = scalar_lea.vmem [#allocation3], %s302
        // Predicated region
        $region70: #{tpu_custom_call.1} parent=68 // pred_check
          %p304 = pneg %p69
        $region71: #{tpu_custom_call.1} parent=68 // pred_check_branch
          %306 = sbr.rel (%p304) target = $region73
        $region72: #{tpu_custom_call.1} parent=68 // pred_region
          _
        $region73: #{tpu_custom_call.1} parent=68 // pred_fallthru
          _
        %s307 = sand.u32 %s114, 1
        %s308 = scalar_lea.sflag [#allocation5], %s307
        %s309 = sand.u32 %s114, 1
        %s310 = smul.addr %s309, 64
        %s311 = scalar_lea.vmem [#allocation4], %s310
        // Predicated region
        $region74: #{tpu_custom_call.1} parent=68 // pred_check
          %p312 = pneg %p127
        $region75: #{tpu_custom_call.1} parent=68 // pred_check_branch
          %314 = sbr.rel (%p312) target = $region77
        $region76: #{tpu_custom_call.1} parent=68 // pred_region
          %315 = dma.done %s308, 1024
        $region77: #{tpu_custom_call.1} parent=68 // pred_fallthru
          _
        %s316 = sand.u32 %s56, 1
        %s317 = sand.u32 %s56, 1
        %s318 = smul.addr %s317, 32
        %s319 = scalar_lea.vmem [#allocation3], %s318
        %p320 = pneg %p69
        %p321 = pneg %p66
        %s322 = smul.u32 8, %s27
        %p323 = scmp.lt.s32.totalorder %s29, 3
        %s324 = scalar_select %p323, %s29, 3
        %p325 = scmp.lt.s32.totalorder %s322, 15
        %s326 = scalar_select %p325, %s322, 15
        %s327 = smul.addr %s324, 16
        %s328 = sadd.s32 %s326, %s327
        %s329 = smul.addr %s328, 8
        %s330 = scalar_lea.vmem %s1, %s329
        %p331 = pneg %p97
        %p332 = pneg %p94
        %s333 = sand.u32 %s114, 1
        %s334 = scalar_lea.sflag [#allocation5], %s333
        %s335 = sand.u32 %s114, 1
        %s336 = smul.addr %s335, 64
        %s337 = scalar_lea.vmem [#allocation4], %s336
        %p338 = pneg %p127
        %p339 = pneg %p124
        %p340 = pneg %p155
        %p341 = pneg %p152
        %s342 = sand.u32 %s142, 1
        %s343 = scalar_lea.sflag [#allocation6], %s342
        %s344 = sand.u32 %s142, 1
        %s345 = smul.addr %s344, 32
        %s346 = scalar_lea.vmem [#allocation7], %s345
        %s347 = smul.u32 8, %s27
        %s348 = smul.u32 8, %s27
        %p349 = scmp.lt.s32.totalorder %s29, 3
        %s350 = scalar_select %p349, %s29, 3
        %p351 = scmp.lt.s32.totalorder %s348, 15
        %s352 = scalar_select %p351, %s348, 15
        %s353 = smul.addr %s350, 16
        %s354 = sadd.s32 %s352, %s353
        %s355 = smul.addr %s354, 8
        %s356 = scalar_lea.vmem %s1, %s355
        %s357 = smul.u32 8, %s27
        %s358 = smul.u32 16, %s28
        %s359 = smul.u32 8, %s27
        %p361 = scmp.eq.s32.totalorder %s28, 0
        %p362 = scmp.eq.s32.totalorder %s29, 0
        %p363 = pnand %p361, %p362
        %p364 = pneg %p363
        // Predicated region
        $region78: #{tpu_custom_call.1} parent=68 // pred_check
          _
        $region79: #{tpu_custom_call.1} parent=68 // pred_check_branch
          %366 = sbr.rel (%p363) target = $region81
        $region80: #{tpu_custom_call.1} parent=68 // pred_region
          %367 = vst [vmem:[#allocation2] sm:$0xff] 0.0
          %368 = vst [vmem:[#allocation2 + $0x8] sm:$0xff] 0.0
          %369 = vst [vmem:[#allocation2 + $0x10] sm:$0xff] 0.0
          %370 = vst [vmem:[#allocation2 + $0x18] sm:$0xff] 0.0
          %371 = vst [vmem:[#allocation2 + $0x20] sm:$0xff] 0.0
          %372 = vst [vmem:[#allocation2 + $0x28] sm:$0xff] 0.0
          %373 = vst [vmem:[#allocation2 + $0x30] sm:$0xff] 0.0
          %374 = vst [vmem:[#allocation2 + $0x38] sm:$0xff] 0.0
        $region81: #{tpu_custom_call.1} parent=68 // pred_fallthru
          _
        %v375 = vld [vmem:[%s303] sm:$0xf]
        %v376 = vld [vmem:[%s303 + $0x4] sm:$0xf]
        %v377 = vld [vmem:[%s303 + $0x8] sm:$0xf]
        %v378 = vld [vmem:[%s303 + $0xc] sm:$0xf]
        %v379 = vld [vmem:[%s303 + $0x10] sm:$0xf]
        %v380 = vld [vmem:[%s303 + $0x14] sm:$0xf]
        %v381 = vld [vmem:[%s303 + $0x18] sm:$0xf]
        %v382 = vld [vmem:[%s303 + $0x1c] sm:$0xf]
        %v383 = vld [vmem:[%s311] sm:$0xf]
        %v384 = vld [vmem:[%s311 + $0x4] sm:$0xf]
        %v385 = vld [vmem:[%s311 + $0x8] sm:$0xf]
        %v386 = vld [vmem:[%s311 + $0xc] sm:$0xf]
        %v387 = vld [vmem:[%s311 + $0x10] sm:$0xf]
        %v388 = vld [vmem:[%s311 + $0x14] sm:$0xf]
        %v389 = vld [vmem:[%s311 + $0x18] sm:$0xf]
        %v390 = vld [vmem:[%s311 + $0x1c] sm:$0xf]
        %v391 = vld [vmem:[%s311 + $0x20] sm:$0xf]
        %v392 = vld [vmem:[%s311 + $0x24] sm:$0xf]
        %v393 = vld [vmem:[%s311 + $0x28] sm:$0xf]
        %v394 = vld [vmem:[%s311 + $0x2c] sm:$0xf]
        %v395 = vld [vmem:[%s311 + $0x30] sm:$0xf]
        %v396 = vld [vmem:[%s311 + $0x34] sm:$0xf]
        %v397 = vld [vmem:[%s311 + $0x38] sm:$0xf]
        %v398 = vld [vmem:[%s311 + $0x3c] sm:$0xf]
        %v407 = vunpack.c.l.b16 %v375
        %v408 = vunpack.c.l.b16 %v376
        %v409 = vunpack.c.l.b16 %v377
        %v410 = vunpack.c.l.b16 %v378
        %v411 = vunpack.c.l.b16 %v379
        %v412 = vunpack.c.l.b16 %v380
        %v413 = vunpack.c.l.b16 %v381
        %v414 = vunpack.c.l.b16 %v382
        %v415 = vpack.c.b16 %v408, %v407
        %v416 = vpack.c.b16 %v410, %v409
        %v417 = vpack.c.b16 %v412, %v411
        %v418 = vpack.c.b16 %v414, %v413
        %v439 = vunpack.c.l.b16 %v383
        %v440 = vunpack.c.l.b16 %v384
        %v441 = vunpack.c.l.b16 %v385
        %v442 = vunpack.c.l.b16 %v386
        %v443 = vunpack.c.l.b16 %v387
        %v444 = vunpack.c.l.b16 %v388
        %v445 = vunpack.c.l.b16 %v389
        %v446 = vunpack.c.l.b16 %v390
        %v447 = vunpack.c.l.b16 %v391
        %v448 = vunpack.c.l.b16 %v392
        %v449 = vunpack.c.l.b16 %v393
        %v450 = vunpack.c.l.b16 %v394
        %v451 = vunpack.c.l.b16 %v395
        %v452 = vunpack.c.l.b16 %v396
        %v453 = vunpack.c.l.b16 %v397
        %v454 = vunpack.c.l.b16 %v398
        %v455 = vpack.c.b16 %v440, %v439
        %v456 = vpack.c.b16 %v442, %v441
        %v457 = vpack.c.b16 %v444, %v443
        %v458 = vpack.c.b16 %v446, %v445
        %v459 = vpack.c.b16 %v448, %v447
        %v460 = vpack.c.b16 %v450, %v449
        %v461 = vpack.c.b16 %v452, %v451
        %v462 = vpack.c.b16 %v454, %v453
        %471 = vmatprep.subr.bf16.mxu0 0
        %472 = vmatpush1.bf16.msra.mxu0 %v462
        %473 = vmatprep.subr.bf16.mxu0 0
        %474 = vmatpush1.bf16.msra.mxu0 %v461
        %475 = vmatprep.subr.bf16.mxu0 0
        %476 = vmatpush1.bf16.msra.mxu0 %v460
        %477 = vmatprep.subr.bf16.mxu0 0
        %478 = vmatpush1.bf16.msra.mxu0 %v459
        %479 = vmatprep.subr.bf16.mxu0 0
        %480 = vmatpush1.bf16.msra.mxu0 %v458
        %481 = vmatprep.subr.bf16.mxu0 0
        %482 = vmatpush1.bf16.msra.mxu0 %v457
        %483 = vmatprep.subr.bf16.mxu0 0
        %484 = vmatpush1.bf16.msra.mxu0 %v456
        %485 = vmatprep.subr.bf16.mxu0 0
        %486 = vmatpush1.bf16.msra.mxu0 %v455
        %487 = vmatprep.subr.bf16.mxu0 0
        %488 = vmatpush2.bf16.msra.mxu0 0
        %489 = vmatprep.subr.bf16.mxu0 0
        %490 = vmatpush2.bf16.msra.mxu0 0
        %491 = vmatprep.subr.bf16.mxu0 0
        %492 = vmatpush2.bf16.msra.mxu0 0
        %493 = vmatprep.subr.bf16.mxu0 0
        %494 = vmatpush2.bf16.msra.mxu0 0
        %495 = vmatprep.subr.bf16.mxu0 0
        %496 = vmatpush2.bf16.msra.mxu0 0
        %497 = vmatprep.subr.bf16.mxu0 0
        %498 = vmatpush2.bf16.msra.mxu0 0
        %499 = vmatprep.subr.bf16.mxu0 0
        %500 = vmatpush2.bf16.msra.mxu0 0
        %501 = vmatprep.subr.bf16.mxu0 0
        %502 = vmatpush2.bf16.msra.mxu0 0
        %503 = vmatprep.mubr.bf16.mxu0 0
        %504 = vmatmul.mubr.bf16.gmra.mxu0 %v415
        %v505 = vpop.f32.mrf.mxu0
        %v506 = vadd.f32 0.0, %v505
        %v507 = vpop.f32.mrf.mxu0
        %v508 = vpop.f32.mrf.mxu0
        %v509 = vadd.f32 0.0, %v508
        %v510 = vpop.f32.mrf.mxu0
        %511 = vmatprep.mubr.bf16.mxu0 0
        %512 = vmatmul.mubr.bf16.gmra.mxu0 %v416
        %v513 = vpop.f32.mrf.mxu0
        %v514 = vadd.f32 0.0, %v513
        %v515 = vpop.f32.mrf.mxu0
        %v516 = vpop.f32.mrf.mxu0
        %v517 = vadd.f32 0.0, %v516
        %v518 = vpop.f32.mrf.mxu0
        %519 = vmatprep.mubr.bf16.mxu0 0
        %520 = vmatmul.mubr.bf16.gmra.mxu0 %v417
        %v521 = vpop.f32.mrf.mxu0
        %v522 = vadd.f32 0.0, %v521
        %v523 = vpop.f32.mrf.mxu0
        %v524 = vpop.f32.mrf.mxu0
        %v525 = vadd.f32 0.0, %v524
        %v526 = vpop.f32.mrf.mxu0
        %527 = vmatprep.mubr.bf16.mxu0 0
        %528 = vmatmul.mubr.bf16.gmra.mxu0 %v418
        %v529 = vpop.f32.mrf.mxu0
        %v530 = vadd.f32 0.0, %v529
        %v531 = vpop.f32.mrf.mxu0
        %v532 = vpop.f32.mrf.mxu0
        %v533 = vadd.f32 0.0, %v532
        %v534 = vpop.f32.mrf.mxu0
        %535 = vdwg.mxu0
        %v536 = vld [vmem:[#allocation2] sm:$0xff]
        %v537 = vld [vmem:[#allocation2 + $0x8] sm:$0xff]
        %v538 = vld [vmem:[#allocation2 + $0x10] sm:$0xff]
        %v539 = vld [vmem:[#allocation2 + $0x18] sm:$0xff]
        %v540 = vld [vmem:[#allocation2 + $0x20] sm:$0xff]
        %v541 = vld [vmem:[#allocation2 + $0x28] sm:$0xff]
        %v542 = vld [vmem:[#allocation2 + $0x30] sm:$0xff]
        %v543 = vld [vmem:[#allocation2 + $0x38] sm:$0xff]
        %v544 = vld [vmem:[%s356] sm:$0xff]
        %v545 = vld [vmem:[%s356 + $0x8] sm:$0xff]
        %v546 = vld [vmem:[%s356 + $0x10] sm:$0xff]
        %v547 = vld [vmem:[%s356 + $0x18] sm:$0xff]
        %v548 = vld [vmem:[%s356 + $0x20] sm:$0xff]
        %v549 = vld [vmem:[%s356 + $0x28] sm:$0xff]
        %v550 = vld [vmem:[%s356 + $0x30] sm:$0xff]
        %v551 = vld [vmem:[%s356 + $0x38] sm:$0xff]
        %553 = vset.pattern.permute.xlu0 0
        %554 = vperm.xlu0 %553, %v544
        %v555 = vpop.permute.xlu0 %554
        %558 = vset.pattern.permute.xlu0 0
        %559 = vperm.xlu0 %558, %v545
        %v560 = vpop.permute.xlu0 %559
        %563 = vset.pattern.permute.xlu0 0
        %564 = vperm.xlu0 %563, %v546
        %v565 = vpop.permute.xlu0 %564
        %568 = vset.pattern.permute.xlu0 0
        %569 = vperm.xlu0 %568, %v547
        %v570 = vpop.permute.xlu0 %569
        %573 = vset.pattern.permute.xlu0 0
        %574 = vperm.xlu0 %573, %v548
        %v575 = vpop.permute.xlu0 %574
        %578 = vset.pattern.permute.xlu0 0
        %579 = vperm.xlu0 %578, %v549
        %v580 = vpop.permute.xlu0 %579
        %583 = vset.pattern.permute.xlu0 0
        %584 = vperm.xlu0 %583, %v550
        %v585 = vpop.permute.xlu0 %584
        %588 = vset.pattern.permute.xlu0 0
        %589 = vperm.xlu0 %588, %v551
        %v590 = vpop.permute.xlu0 %589
        %v592 = vmul.f32 %v555, %v506
        %v593 = vmul.f32 %v560, %v509
        %v594 = vmul.f32 %v565, %v514
        %v595 = vmul.f32 %v570, %v517
        %v596 = vmul.f32 %v575, %v522
        %v597 = vmul.f32 %v580, %v525
        %v598 = vmul.f32 %v585, %v530
        %v599 = vmul.f32 %v590, %v533
        %v600 = vadd.f32 %v536, %v592
        %v601 = vadd.f32 %v537, %v593
        %v602 = vadd.f32 %v538, %v594
        %v603 = vadd.f32 %v539, %v595
        %v604 = vadd.f32 %v540, %v596
        %v605 = vadd.f32 %v541, %v597
        %v606 = vadd.f32 %v542, %v598
        %v607 = vadd.f32 %v543, %v599
        %608 = vst [vmem:[#allocation2] sm:$0xff] %v600
        %609 = vst [vmem:[#allocation2 + $0x8] sm:$0xff] %v601
        %610 = vst [vmem:[#allocation2 + $0x10] sm:$0xff] %v602
        %611 = vst [vmem:[#allocation2 + $0x18] sm:$0xff] %v603
        %612 = vst [vmem:[#allocation2 + $0x20] sm:$0xff] %v604
        %613 = vst [vmem:[#allocation2 + $0x28] sm:$0xff] %v605
        %614 = vst [vmem:[#allocation2 + $0x30] sm:$0xff] %v606
        %615 = vst [vmem:[#allocation2 + $0x38] sm:$0xff] %v607
        %p616 = scmp.eq.s32.totalorder %s28, 1
        %p617 = scmp.eq.s32.totalorder %s29, 3
        %p618 = pnand %p616, %p617
        %p619 = pneg %p618
        // Predicated region
        $region82: #{tpu_custom_call.1} parent=68 // pred_check
          _
        $region83: #{tpu_custom_call.1} parent=68 // pred_check_branch
          %621 = sbr.rel (%p618) target = $region85
        $region84: #{tpu_custom_call.1} parent=68 // pred_region
          %v622 = vld [vmem:[#allocation2] sm:$0xff]
          %v623 = vld [vmem:[#allocation2 + $0x8] sm:$0xff]
          %v624 = vld [vmem:[#allocation2 + $0x10] sm:$0xff]
          %v625 = vld [vmem:[#allocation2 + $0x18] sm:$0xff]
          %v626 = vld [vmem:[#allocation2 + $0x20] sm:$0xff]
          %v627 = vld [vmem:[#allocation2 + $0x28] sm:$0xff]
          %v628 = vld [vmem:[#allocation2 + $0x30] sm:$0xff]
          %v629 = vld [vmem:[#allocation2 + $0x38] sm:$0xff]
          %v630 = vpack.c.bf16 %v623, %v622
          %v631 = vpack.c.bf16 %v625, %v624
          %v632 = vpack.c.bf16 %v627, %v626
          %v633 = vpack.c.bf16 %v629, %v628
          %v638 = vunpack.c.l.b16 %v630
          %v639 = vunpack.c.h.b16 %v630
          %v640 = vunpack.c.l.b16 %v631
          %v641 = vunpack.c.h.b16 %v631
          %v642 = vunpack.c.l.b16 %v632
          %v643 = vunpack.c.h.b16 %v632
          %v644 = vunpack.c.l.b16 %v633
          %v645 = vunpack.c.h.b16 %v633
          %v646 = vpack.c.b16 %v638, %v638
          %v647 = vpack.c.b16 %v639, %v639
          %v648 = vpack.c.b16 %v640, %v640
          %v649 = vpack.c.b16 %v641, %v641
          %v650 = vpack.c.b16 %v642, %v642
          %v651 = vpack.c.b16 %v643, %v643
          %v652 = vpack.c.b16 %v644, %v644
          %v653 = vpack.c.b16 %v645, %v645
          %662 = vst [vmem:[%s346] sm:$0xf] %v646
          %663 = vst [vmem:[%s346 + $0x4] sm:$0xf] %v647
          %664 = vst [vmem:[%s346 + $0x8] sm:$0xf] %v648
          %665 = vst [vmem:[%s346 + $0xc] sm:$0xf] %v649
          %666 = vst [vmem:[%s346 + $0x10] sm:$0xf] %v650
          %667 = vst [vmem:[%s346 + $0x14] sm:$0xf] %v651
          %668 = vst [vmem:[%s346 + $0x18] sm:$0xf] %v652
          %669 = vst [vmem:[%s346 + $0x1c] sm:$0xf] %v653
        $region85: #{tpu_custom_call.1} parent=68 // pred_fallthru
          _
        %s670 = sand.u32 %s142, 1
        %s671 = scalar_lea.sflag [#allocation6], %s670
        %s672 = sand.u32 %s142, 1
        %s673 = smul.addr %s672, 32
        %s674 = scalar_lea.vmem [#allocation7], %s673
        // Predicated region
        $region86: #{tpu_custom_call.1} parent=68 // pred_check
          %p675 = pneg %p152
        $region87: #{tpu_custom_call.1} parent=68 // pred_check_branch
          %677 = sbr.rel (%p675) target = $region89
        $region88: #{tpu_custom_call.1} parent=68 // pred_region
          %s678 = smul.u32 8, %s27
          %s680 = ssub.s32 512, 512
          %681 = vsyncadd %s671, %s680
          %s682 = smul.addr %s678, 2
          %s683 = sadd.s32 %s26, %s682
          %s684 = smul.addr %s683, 64
          %s685 = scalar_lea.hbm %s3, %s684
          %s686 = sshll.u32 %s674, 4
          %s687 = int_to_ptr.vmem [resolvable:$true] %s686
          %692 = dma.vmem_to_hbm [thread:$0]  %s687, 512, %s685, %s671, 64, 128, 4
        $region89: #{tpu_custom_call.1} parent=68 // pred_fallthru
          _
      $region69: #{tpu_custom_call.1} parent=5 // pred_fallthru
        _
      %p693 = scmp.le.s32.totalorder 2, %s15
      // Predicated region
      $region90: #{tpu_custom_call.1} parent=5 // pred_check
        %p694 = pneg %p693
      $region91: #{tpu_custom_call.1} parent=5 // pred_check_branch
        %696 = sbr.rel (%p694) target = $region93
      $region92: #{tpu_custom_call.1} parent=5 // pred_region
        %s697 = ssub.s32 %s15, 2
        // Predicated region
        $region94: #{tpu_custom_call.1} parent=92 // pred_check
          %p698 = pneg %p158
        $region95: #{tpu_custom_call.1} parent=92 // pred_check_branch
          %700 = sbr.rel (%p698) target = $region97
        $region96: #{tpu_custom_call.1} parent=92 // pred_region
          %s701 = sand.u32 %s143, 1
          %s702 = scalar_lea.sflag [#allocation6], %s701
          %s703 = sand.u32 %s143, 1
          %s704 = smul.addr %s703, 32
          %s705 = scalar_lea.vmem [#allocation7], %s704
          %706 = dma.done %s702, 512
        $region97: #{tpu_custom_call.1} parent=92 // pred_fallthru
          _
      $region93: #{tpu_custom_call.1} parent=5 // pred_fallthru
        _
    $region6: #{tpu_custom_call.1} parent=1 // loop_footer
      %s19 = sadd.s32 1, %s15
    $region7: #{tpu_custom_call.1} parent=1 // loop_footer_branch
      %14 = sbr.rel target = $region3
    $region8: #{tpu_custom_call.1} parent=1 // loop_exit
      _
    %707 = vsyncpa [#allocation5], 1
    %s708 = scalar_lea.sflag [#allocation5], 1
    %709 = vsyncpa %s708, 1
    %710 = vsyncpa [#allocation6], 1
    %s711 = scalar_lea.sflag [#allocation6], 1
    %712 = vsyncpa %s711, 1

</llo_original>
